<compile_context>
chip_gen: v7x
topology: tpu7x:2x2x1
jax: 0.10.0
libtpu: 0.0.40
codegen_flags: <defaults>
</compile_context>

<pallas_src>
import functools
import math

import jax
import jax.numpy as jnp
from jax.experimental import pallas as pl
from jax.experimental.pallas import tpu as pltpu


# ----------------------------------------------------------------------------
# Kernel 1: Bt graphs per grid step:
#   y = adj @ x @ W + bias   (association order chosen at wrap time)
#   plus per-step partial channel sum / sum-of-squares.
# ----------------------------------------------------------------------------
def gcn_matmul_kernel(x_ref, adj_ref, w_ref, bias_ref, y_ref, sum_ref, sq_ref,
                      *, adj_first):
    Bt, Np, Fin = x_ref.shape
    Fout = w_ref.shape[1]
    mm_dtype = w_ref.dtype

    if Bt == 1:
        # Plain 2-D MXU matmuls (no batch dim to carry around).
        adj2d = adj_ref[0]
        if adj_first:
            tmp = jnp.dot(adj2d, x_ref[0], preferred_element_type=jnp.float32)
            out2d = jnp.dot(tmp.astype(mm_dtype), w_ref[...],
                            preferred_element_type=jnp.float32)
        else:
            sup = jnp.dot(x_ref[0], w_ref[...],
                          preferred_element_type=jnp.float32)
            out2d = jnp.dot(adj2d, sup.astype(mm_dtype),
                            preferred_element_type=jnp.float32)
    else:
        # Leading-dim reshapes only (N padded to a sublane multiple), so they
        # stay layout no-ops.
        if adj_first:
            tmp = jnp.einsum('bij,bjf->bif', adj_ref[...], x_ref[...],
                             preferred_element_type=jnp.float32)
            out2d = jnp.dot(tmp.astype(mm_dtype).reshape(Bt * Np, Fin),
                            w_ref[...], preferred_element_type=jnp.float32)
        else:
            sup = jnp.dot(x_ref[...].reshape(Bt * Np, Fin), w_ref[...],
                          preferred_element_type=jnp.float32)
            out = jnp.einsum('bij,bjf->bif', adj_ref[...],
                             sup.astype(mm_dtype).reshape(Bt, Np, Fout),
                             preferred_element_type=jnp.float32)
            out2d = out.reshape(Bt * Np, Fout)

    out2d = out2d + bias_ref[...]                       # f32 epilogue
    # Per-grid-step partial BatchNorm statistics (reduced in the wrapper).
    sum_ref[0] = jnp.sum(out2d, axis=0, keepdims=True)
    sq_ref[0] = jnp.sum(out2d * out2d, axis=0, keepdims=True)
    # TODO(synk): for Fout < 128 this store is lane-masked; folding rows into
    # lanes here would need an in-kernel lane-crossing relayout (reshape), so
    # the fold is done for free in HBM between the two passes instead and the
    # mem-bound pass 2 stays fully lane-dense.
    y_ref[...] = out2d.astype(y_ref.dtype)


# ----------------------------------------------------------------------------
# Kernel 2: folded BatchNorm (y*scale + shift) + LeakyReLU, lane-dense layout.
# ----------------------------------------------------------------------------
def bn_leaky_kernel(y_ref, scale_ref, shift_ref, o_ref, *, negative_slope):
    z = y_ref[...].astype(jnp.float32) * scale_ref[...] + shift_ref[...]
    o_ref[...] = jnp.where(z > 0, z, negative_slope * z)


# ----------------------------------------------------------------------------
# Tiling helpers
# ----------------------------------------------------------------------------
def _round_up(v, m):
    return -(-v // m) * m


def _vmem_budget_bytes():
    """Generation-aware per-TensorCore VMEM budget (with headroom)."""
    kind = ""
    try:
        kind = jax.devices()[0].device_kind.lower()
    except Exception:
        pass
    if ("v5 lite" in kind) or ("v5e" in kind) or ("v6" in kind):
        cap = 128 * 1024 * 1024          # v5e / v6e
    else:
        cap = 64 * 1024 * 1024           # v7x per-TC (and conservative default)
    return min((cap * 3) // 4, 100 * 1024 * 1024)


def _pick_batch_tile(B, N, Fin, Fout, in_itemsize, y_itemsize, budget_bytes):
    """Largest Bt whose pass-1 working set fits the VMEM budget.

    Accounts for double-buffered x/adj input blocks, the double-buffered y
    output block, the f32 matmul intermediates, and resident W/bias/stats."""
    per_graph = (2 * (N * Fin + N * N) * in_itemsize     # x, adj blocks (x2)
                 + 2 * N * Fout * y_itemsize             # y block (x2)
                 + 2 * N * Fout * 4)                     # f32 intermediates
    fixed = 2 * Fin * Fout * in_itemsize + 8 * Fout * 4  # W, bias, sum, sq
    avail = max(budget_bytes - fixed, per_graph)
    bt = int(min(B, max(1, avail // per_graph)))
    # Keep >= 2 grid steps so dimension_semantics=("parallel",) can shard the
    # batch grid across TensorCores (v7x has 2 TCs per chip).  Cost elsewhere
    # is a single extra ~0.35us grid step.
    if B >= 2:
        bt = min(bt, -(-B // 2))
    return bt
    # TODO(synk): very large N (single-graph working set > budget) would need
    # node-dimension tiling of the adjacency matmul as well.


def _pick_lane_fold(N_pad, Fout):
    """Fold k rows into the lane axis so pass 2's last dim is (ideally) a
    multiple of 128.  k divides N_pad so every pass-1 block folds evenly;
    when Fout forces a larger k than N_pad allows, k degrades gracefully to
    the largest power of two dividing N_pad instead of collapsing to 1."""
    k0 = 128 // math.gcd(Fout, 128)
    k = 1
    while k < k0 and N_pad % (2 * k) == 0:
        k *= 2
    return k


def _pick_row_block(R, lane, sub, target_bytes=4 * 1024 * 1024):
    """Row block for the streaming pass: ~4 MiB f32 output blocks (near the
    HBM roofline).  Never an oversized whole-array block: if the array is
    larger than the budgeted block and no divisor exists, the caller uses a
    cdiv grid with a masked tail (safe for a pure elementwise kernel)."""
    target = max(sub, (target_bytes // (lane * 4)) // sub * sub)
    if R <= target:
        return R
    for cand in range(target, sub - 1, -sub):
        if R % cand == 0:
            return cand
    return target


# ----------------------------------------------------------------------------
# Wrapper
# ----------------------------------------------------------------------------
def gcn_forward(x, adj, weight, bias, gamma, beta, *, eps=1e-5,
                negative_slope=0.01, matmul_dtype=jnp.bfloat16):
    """adj @ (x @ W) + bias -> training-mode BatchNorm1d (per channel) ->
    LeakyReLU.  bf16 MXU inputs by default (f32 accumulation / statistics);
    pass matmul_dtype=jnp.float32 for exact f32 parity with the reference."""
    B, N, Fin = x.shape
    Fout = weight.shape[1]

    in_itemsize = jnp.dtype(matmul_dtype).itemsize
    y_dtype = matmul_dtype if in_itemsize < 4 else jnp.float32
    y_itemsize = jnp.dtype(y_dtype).itemsize
    budget = _vmem_budget_bytes()

    # Padding: N up to a sublane multiple (keeps in-kernel (Bt,N,*)<->(Bt*N,*)
    # reshapes layout no-ops), B up to a multiple of the batch tile.
    sub_in = max(8, 32 // in_itemsize)
    N_pad = _round_up(N, sub_in)
    Bt = _pick_batch_tile(B, N_pad, Fin, Fout, in_itemsize, y_itemsize, budget)
    B_pad = _round_up(B, Bt)
    G = B_pad // Bt

    adj_first = Fin < Fout          # contract adjacency with the smaller dim

    x_c = x.astype(matmul_dtype)
    adj_c = adj.astype(matmul_dtype)
    if (B_pad, N_pad) != (B, N):
        x_c = jnp.zeros((B_pad, N_pad, Fin), matmul_dtype
                        ).at[:B, :N, :].set(x_c)
        adj_c = jnp.zeros((B_pad, N_pad, N_pad), matmul_dtype
                          ).at[:B, :N, :N].set(adj_c)
    w_c = weight.astype(matmul_dtype)
    bias_f32 = bias.astype(jnp.float32)
    bias2d = bias_f32.reshape(1, Fout)

    rows = B_pad * N_pad
    rows_blk = Bt * N_pad
    c_min = min(Fin, Fout)
    cost1 = pl.CostEstimate(
        flops=2 * rows * (N_pad * c_min + Fin * Fout),
        transcendentals=0,
        bytes_accessed=(rows * Fin + B_pad * N_pad * N_pad + Fin * Fout)
        * in_itemsize + rows * Fout * y_itemsize + (1 + 2 * G) * Fout * 4,
    )

    y_flat, psum, psq = pl.pallas_call(
        functools.partial(gcn_matmul_kernel, adj_first=adj_first),
        out_shape=(
            jax.ShapeDtypeStruct((rows, Fout), y_dtype),
            jax.ShapeDtypeStruct((G, 1, Fout), jnp.float32),
            jax.ShapeDtypeStruct((G, 1, Fout), jnp.float32),
        ),
        grid_spec=pltpu.PrefetchScalarGridSpec(
            num_scalar_prefetch=0,
            grid=(G,),
            in_specs=[
                pl.BlockSpec((Bt, N_pad, Fin), lambda g: (g, 0, 0)),
                pl.BlockSpec((Bt, N_pad, N_pad), lambda g: (g, 0, 0)),
                pl.BlockSpec((Fin, Fout), lambda g: (0, 0)),
                pl.BlockSpec((1, Fout), lambda g: (0, 0)),
            ],
            out_specs=[
                pl.BlockSpec((rows_blk, Fout), lambda g: (g, 0)),
                pl.BlockSpec((1, 1, Fout), lambda g: (g, 0, 0)),
                pl.BlockSpec((1, 1, Fout), lambda g: (g, 0, 0)),
            ],
        ),
        compiler_params=pltpu.CompilerParams(
            dimension_semantics=("parallel",),
            vmem_limit_bytes=budget),
        cost_estimate=cost1,
    )(x_c, adj_c, w_c, bias2d)

    # --- XLA glue: training-mode BatchNorm statistics over the B*N real rows
    # (biased variance) folded into per-channel scale/shift.  Zero-padded rows
    # contribute exactly `bias` each and are removed analytically.
    count = jnp.float32(B * N)
    ch_sum = jnp.sum(psum, axis=(0, 1))                  # (Fout,)
    ch_sq = jnp.sum(psq, axis=(0, 1))                    # (Fout,)
    n_pad_rows = rows - B * N
    if n_pad_rows:
        ch_sum = ch_sum - n_pad_rows * bias_f32
        ch_sq = ch_sq - n_pad_rows * bias_f32 * bias_f32
    mean = ch_sum / count
    # E[x^2]-mean^2 in f32; clamp guards tiny negative cancellation residue.
    var = jnp.maximum(ch_sq / count - mean * mean, 0.0)
    invstd = jax.lax.rsqrt(var + eps)
    scale = gamma.astype(jnp.float32) * invstd           # (Fout,)
    shift = beta.astype(jnp.float32) - mean * scale      # (Fout,)
    # TODO(synk): BatchNorm1d running_mean/running_var momentum updates are a
    # training side effect and are not produced here (forward math unaffected).

    # --- pass 2: lane-dense streaming BN + LeakyReLU over flattened rows.
    k = _pick_lane_fold(N_pad, Fout)
    R = rows // k
    lane = k * Fout
    y2 = y_flat.reshape(R, lane)            # contiguous in HBM -> free
    scale_row = jnp.tile(scale.reshape(1, Fout), (1, k))     # (1, k*Fout)
    shift_row = jnp.tile(shift.reshape(1, Fout), (1, k))     # (1, k*Fout)

    sub_y = max(8, 32 // y_itemsize)
    br = _pick_row_block(R, lane, sub_y)
    grid2 = pl.cdiv(R, br)
    cost2 = pl.CostEstimate(
        flops=3 * R * lane, transcendentals=0,
        bytes_accessed=R * lane * (y_itemsize + 4) + 2 * lane * 4)
    # In-place on the f32 path (same shape & dtype -> alias the y buffer).
    alias = {0: 0} if y_itemsize == 4 else {}

    out2 = pl.pallas_call(
        functools.partial(bn_leaky_kernel, negative_slope=negative_slope),
        out_shape=jax.ShapeDtypeStruct((R, lane), jnp.float32),
        grid_spec=pltpu.PrefetchScalarGridSpec(
            num_scalar_prefetch=0,
            grid=(grid2,),
            in_specs=[
                pl.BlockSpec((br, lane), lambda r: (r, 0)),
                pl.BlockSpec((1, lane), lambda r: (0, 0)),
                pl.BlockSpec((1, lane), lambda r: (0, 0)),
            ],
            out_specs=pl.BlockSpec((br, lane), lambda r: (r, 0)),
        ),
        compiler_params=pltpu.CompilerParams(
            dimension_semantics=("parallel",),
            vmem_limit_bytes=budget),
        cost_estimate=cost2,
        input_output_aliases=alias,
    )(y2, scale_row, shift_row)

    out = out2.reshape(B_pad, N_pad, Fout)
    if (B_pad, N_pad) != (B, N):
        out = out[:B, :N, :]
    return out


# ----------------------------------------------------------------------------
# Pure-JAX reference (mirrors the PyTorch forward in training mode)
# ----------------------------------------------------------------------------
def gcn_reference(x, adj, weight, bias, gamma, beta, *, eps=1e-5,
                  negative_slope=0.01):
    support = jnp.matmul(x, weight)
    output = jnp.matmul(adj, support) + bias
    mean = jnp.mean(output, axis=(0, 1), keepdims=True)
    var = jnp.mean((output - mean) ** 2, axis=(0, 1), keepdims=True)
    xhat = (output - mean) / jnp.sqrt(var + eps)
    z = xhat * gamma + beta
    return jnp.where(z > 0, z, negative_slope * z)


if __name__ == "__main__":
    B, N = 2, 16
    in_features, out_features = 16, 32

    key = jax.random.PRNGKey(0)
    kx, ka, kw, kb = jax.random.split(key, 4)

    # Deterministic parameter init matching reset_parameters semantics.
    stdv = 1.0 / math.sqrt(out_features)
    weight = jax.random.uniform(kw, (in_features, out_features),
                                jnp.float32, -stdv, stdv)
    bias = jax.random.uniform(kb, (out_features,), jnp.float32, -stdv, stdv)
    gamma = jnp.ones((out_features,), jnp.float32)   # BatchNorm1d weight
    beta = jnp.zeros((out_features,), jnp.float32)   # BatchNorm1d bias

    x = jax.random.normal(kx, (B, N, in_features), jnp.float32)
    adj = jax.random.uniform(ka, (B, N, N), jnp.float32)

    ref = gcn_reference(x, adj, weight, bias, gamma, beta)

    # Exact-parity path (f32 MXU inputs) -- strict tolerance.
    out_f32 = jax.block_until_ready(
        gcn_forward(x, adj, weight, bias, gamma, beta,
                    matmul_dtype=jnp.float32))
    assert out_f32.shape == (B, N, out_features)
    assert jnp.allclose(out_f32, ref, atol=1e-4, rtol=1e-4), "f32 mismatch"

    # Default fast path (bf16 MXU inputs, f32 accumulation / statistics).
    out_bf16 = jax.block_until_ready(
        gcn_forward(x, adj, weight, bias, gamma, beta))
    assert out_bf16.shape == (B, N, out_features)
    assert jnp.allclose(out_bf16, ref, atol=1e-1, rtol=1e-1), "bf16 mismatch"

    print("KERNEL_OK")
</pallas_src>

<mosaic_0001>
module attributes {stable_mosaic.version = 11 : i64} {
  func.func @gcn_matmul_kernel(%arg0: i32, %arg1: memref<1x16x16xf32, #tpu.memory_space<vmem>>, %arg2: memref<1x16x16xf32, #tpu.memory_space<vmem>>, %arg3: memref<16x32xf32, #tpu.memory_space<vmem>>, %arg4: memref<1x32xf32, #tpu.memory_space<vmem>>, %arg5: memref<16x32xf32, #tpu.memory_space<vmem>>, %arg6: memref<1x1x32xf32, #tpu.memory_space<vmem>>, %arg7: memref<1x1x32xf32, #tpu.memory_space<vmem>>) attributes {dimension_semantics = [#tpu.dimension_semantics<parallel>], iteration_bounds = array<i64: 2>, scalar_prefetch = 0 : i64, scratch_operands = 0 : i64, tpu.core_type = #tpu.core_type<tc>, window_params = [{transform_indices = @transform_0, window_bounds = array<i64: 1, 16, 16>}, {transform_indices = @transform_1, window_bounds = array<i64: 1, 16, 16>}, {pipeline_mode = #tpu.pipeline_mode<synchronous>, transform_indices = @transform_2, window_bounds = array<i64: 16, 32>}, {pipeline_mode = #tpu.pipeline_mode<synchronous>, transform_indices = @transform_3, window_bounds = array<i64: 1, 32>}, {transform_indices = @transform_4, window_bounds = array<i64: 16, 32>}, {transform_indices = @transform_5, window_bounds = array<i64: 1, 1, 32>}, {transform_indices = @transform_6, window_bounds = array<i64: 1, 1, 32>}]} {
    %c0 = arith.constant 0 : index
    %c0_0 = arith.constant 0 : index
    %c0_1 = arith.constant 0 : index
    %0 = vector.load %arg2[%c0, %c0_0, %c0_1] : memref<1x16x16xf32, #tpu.memory_space<vmem>>, vector<1x16x16xf32>
    %1 = vector.shape_cast %0 : vector<1x16x16xf32> to vector<16x16xf32>
    %c0_2 = arith.constant 0 : index
    %c0_3 = arith.constant 0 : index
    %c0_4 = arith.constant 0 : index
    %2 = vector.load %arg1[%c0_2, %c0_3, %c0_4] : memref<1x16x16xf32, #tpu.memory_space<vmem>>, vector<1x16x16xf32>
    %3 = vector.shape_cast %2 : vector<1x16x16xf32> to vector<16x16xf32>
    %cst = arith.constant dense<0.000000e+00> : vector<16x16xf32>
    %4 = tpu.matmul %1, %3, %cst {dimension_numbers = #tpu.dot_dimension_numbers<[1], [0], [0], [1], [0, 0, 1, 1], [], []>} : vector<16x16xf32>, vector<16x16xf32>, vector<16x16xf32> -> vector<16x16xf32>
    %c0_5 = arith.constant 0 : index
    %c0_6 = arith.constant 0 : index
    %5 = vector.load %arg3[%c0_5, %c0_6] : memref<16x32xf32, #tpu.memory_space<vmem>>, vector<16x32xf32>
    %cst_7 = arith.constant dense<0.000000e+00> : vector<16x32xf32>
    %6 = tpu.matmul %4, %5, %cst_7 {dimension_numbers = #tpu.dot_dimension_numbers<[1], [0], [0], [1], [0, 0, 1, 1], [], []>} : vector<16x16xf32>, vector<16x32xf32>, vector<16x32xf32> -> vector<16x32xf32>
    %c0_8 = arith.constant 0 : index
    %c0_9 = arith.constant 0 : index
    %7 = vector.load %arg4[%c0_8, %c0_9] : memref<1x32xf32, #tpu.memory_space<vmem>>, vector<1x32xf32>
    %8 = vector.broadcast %7 : vector<1x32xf32> to vector<16x32xf32>
    %9 = arith.addf %6, %8 : vector<16x32xf32>
    %cst_10 = arith.constant dense<0.000000e+00> : vector<32xf32>
    %10 = vector.multi_reduction <add>, %9, %cst_10 [0] : vector<16x32xf32> to vector<32xf32>
    %11 = vector.shape_cast %10 : vector<32xf32> to vector<1x32xf32>
    %c0_11 = arith.constant 0 : index
    %c0_12 = arith.constant 0 : index
    %c0_13 = arith.constant 0 : index
    %12 = vector.load %arg6[%c0_11, %c0_12, %c0_13] : memref<1x1x32xf32, #tpu.memory_space<vmem>>, vector<1x1x32xf32>
    %13 = vector.shape_cast %12 : vector<1x1x32xf32> to vector<1x32xf32>
    %14 = vector.shape_cast %11 : vector<1x32xf32> to vector<1x1x32xf32>
    tpu.vector_store %arg6[%c0_11, %c0_12, %c0_13], %14 {strides = array<i32>} : memref<1x1x32xf32, #tpu.memory_space<vmem>>, vector<1x1x32xf32>,
    %15 = arith.mulf %9, %9 : vector<16x32xf32>
    %cst_14 = arith.constant dense<0.000000e+00> : vector<32xf32>
    %16 = vector.multi_reduction <add>, %15, %cst_14 [0] : vector<16x32xf32> to vector<32xf32>
    %17 = vector.shape_cast %16 : vector<32xf32> to vector<1x32xf32>
    %c0_15 = arith.constant 0 : index
    %c0_16 = arith.constant 0 : index
    %c0_17 = arith.constant 0 : index
    %18 = vector.load %arg7[%c0_15, %c0_16, %c0_17] : memref<1x1x32xf32, #tpu.memory_space<vmem>>, vector<1x1x32xf32>
    %19 = vector.shape_cast %18 : vector<1x1x32xf32> to vector<1x32xf32>
    %20 = vector.shape_cast %17 : vector<1x32xf32> to vector<1x1x32xf32>
    tpu.vector_store %arg7[%c0_15, %c0_16, %c0_17], %20 {strides = array<i32>} : memref<1x1x32xf32, #tpu.memory_space<vmem>>, vector<1x1x32xf32>,
    %c0_18 = arith.constant 0 : index
    %c0_19 = arith.constant 0 : index
    %21 = vector.load %arg5[%c0_18, %c0_19] : memref<16x32xf32, #tpu.memory_space<vmem>>, vector<16x32xf32>
    tpu.vector_store %arg5[%c0_18, %c0_19], %9 {strides = array<i32>} : memref<16x32xf32, #tpu.memory_space<vmem>>, vector<16x32xf32>,
    return
  }
  func.func @transform_0(%arg0: i32) -> (i32, i32, i32) {
    %c0_i32 = arith.constant 0 : i32
    %c0_i32_0 = arith.constant 0 : i32
    %c0_i32_1 = arith.constant 0 : i32
    return %arg0, %c0_i32, %c0_i32_0 : i32, i32, i32
  }
  func.func @transform_1(%arg0: i32) -> (i32, i32, i32) {
    %c0_i32 = arith.constant 0 : i32
    %c0_i32_0 = arith.constant 0 : i32
    %c0_i32_1 = arith.constant 0 : i32
    return %arg0, %c0_i32, %c0_i32_0 : i32, i32, i32
  }
  func.func @transform_2(%arg0: i32) -> (i32, i32) {
    %c0_i32 = arith.constant 0 : i32
    %c0_i32_0 = arith.constant 0 : i32
    %c0_i32_1 = arith.constant 0 : i32
    return %c0_i32, %c0_i32_0 : i32, i32
  }
  func.func @transform_3(%arg0: i32) -> (i32, i32) {
    %c0_i32 = arith.constant 0 : i32
    %c0_i32_0 = arith.constant 0 : i32
    %c0_i32_1 = arith.constant 0 : i32
    return %c0_i32, %c0_i32_0 : i32, i32
  }
  func.func @transform_4(%arg0: i32) -> (i32, i32) {
    %c0_i32 = arith.constant 0 : i32
    %c0_i32_0 = arith.constant 0 : i32
    return %arg0, %c0_i32 : i32, i32
  }
  func.func @transform_5(%arg0: i32) -> (i32, i32, i32) {
    %c0_i32 = arith.constant 0 : i32
    %c0_i32_0 = arith.constant 0 : i32
    %c0_i32_1 = arith.constant 0 : i32
    return %arg0, %c0_i32, %c0_i32_0 : i32, i32, i32
  }
  func.func @transform_6(%arg0: i32) -> (i32, i32, i32) {
    %c0_i32 = arith.constant 0 : i32
    %c0_i32_0 = arith.constant 0 : i32
    %c0_i32_1 = arith.constant 0 : i32
    return %arg0, %c0_i32, %c0_i32_0 : i32, i32, i32
  }
}

</mosaic_0001>

<llo_original>
// kernel: tpu_custom_call.1
$region0: #{tpu_custom_call.1}
  #allocation0 [shape = 'u32[]', space=smem, size = 0x4, offset = 0x4, fixed_abs, tag = 'smem constant byte address 0x4 - core index']
  #allocation1 [shape = 'u32[144,128]{1,0:T(1,128)}', space=vmem, size = 0x12000, scoped, tag = 'internal scratch']
  %s0 = inlined_call_operand.hbm [shape: f32[2,16,16], index: 0, kind: input, shape index: {}]
  %s1 = inlined_call_operand.hbm [shape: f32[2,16,16], index: 1, kind: input, shape index: {}]
  %s2 = inlined_call_operand.hbm [shape: f32[16,32], index: 2, kind: input, shape index: {}]
  %s3 = inlined_call_operand.vmem [shape: f32[1,32], index: 3, kind: input, shape index: {}]
  %s4 = inlined_call_operand.hbm [shape: f32[32,32], index: 4, kind: output, shape index: {0}]
  %s5 = inlined_call_operand.hbm [shape: f32[2,1,32], index: 5, kind: output, shape index: {1}]
  %s6 = inlined_call_operand.hbm [shape: f32[2,1,32], index: 6, kind: output, shape index: {2}]
  %7 = xla_tuple %s4, %s5, %s6
  %s8 = sld [smem:[#allocation0]]
  $region77: #{tpu_custom_call.1} parent=0
    _
  %s10 = ssub.s32 1, %s8
  %s11 = scalar_select 0, %s10, %s8
  $region1: #{tpu_custom_call.1} parent=0
    #allocation2 [shape = 'u8[16384]{0}', space=vmem, size = 0x4000, scoped, tag = 'input window, operand 0']
    #allocation3 [shape = 's32[2]{0}', space=sflag, size = 0x8, scoped, tag = 'scoped memory for tpu_custom_call.1']
    #allocation4 [shape = 's32[2]{0}', space=sflag, size = 0x8, scoped, tag = 'scoped memory for tpu_custom_call.1']
    #allocation5 [shape = 'u8[16384]{0}', space=vmem, size = 0x4000, scoped, tag = 'input window, operand 1']
    #allocation6 [shape = 's32[2]{0}', space=sflag, size = 0x8, scoped, tag = 'scoped memory for tpu_custom_call.1']
    #allocation7 [shape = 'u8[8192]{0}', space=vmem, size = 0x2000, scoped, tag = 'input window, operand 2, single buffered']
    #allocation8 [shape = 'u8[16384]{0}', space=vmem, size = 0x4000, scoped, tag = 'output window, operand 0']
    #allocation9 [shape = 'u8[1024]{0}', space=vmem, size = 0x400, scoped, tag = 'output window, operand 1']
    #allocation10 [shape = 's32[2]{0}', space=sflag, size = 0x8, scoped, tag = 'scoped memory for tpu_custom_call.1']
    #allocation11 [shape = 'u8[1024]{0}', space=vmem, size = 0x400, scoped, tag = 'output window, operand 2']
    %12 = vsyncpa [#allocation3], 0
    %s13 = scalar_lea.sflag [#allocation3], 1
    %14 = vsyncpa %s13, 0
    %15 = vsyncpa [#allocation6], 0
    %s16 = scalar_lea.sflag [#allocation6], 1
    %17 = vsyncpa %s16, 0
    %18 = vsyncpa [#allocation4], 0
    %s19 = scalar_lea.sflag [#allocation4], 1
    %20 = vsyncpa %s19, 0
    %21 = vsyncpa [#allocation10], 0
    %s22 = scalar_lea.sflag [#allocation10], 1
    %23 = vsyncpa %s22, 0
    loop: start=0, step=1, limit=4
    $region2: #{tpu_custom_call.1} parent=1 // loop_pre_header
      _
    $region3: #{tpu_custom_call.1} parent=1 // loop_header
      %s25 = sphi 0, %s29
      %p26 = scmp.ge.s32.totalorder %s25, 4
      %s35 = sphi 0, %s37
      %s38 = sphi 0, %s35
      %s39 = sphi 0, %s38
      %s55 = sphi 0, %s39
      %s61 = sphi 0, %s63
      %s64 = sphi 0, %s61
      %s65 = sphi 0, %s64
      %s81 = sphi 0, %s65
      %s85 = sphi 0, %s85
      %s87 = sphi 0, %s85
      %s88 = sphi 0, %s87
      %s102 = sphi 0, %s88
      %s106 = sphi 0, %s106
      %s108 = sphi 0, %s106
      %s109 = sphi 0, %s108
      %s123 = sphi 0, %s109
      %s129 = sphi 0, %s131
      %s132 = sphi 0, %s129
      %s133 = sphi 0, %s132
      %s149 = sphi 0, %s133
      %s155 = sphi 0, %s157
      %s158 = sphi 0, %s155
      %s159 = sphi 0, %s158
      %s175 = sphi 0, %s159
      %s181 = sphi 0, %s183
      %s184 = sphi 0, %s181
      %s185 = sphi 0, %s184
      %s201 = sphi 0, %s185
    $region4: #{tpu_custom_call.1} parent=1 // loop_header_branch
      %28 = sbr.rel (%p26) target = $region8
    $region5: #{tpu_custom_call.1} parent=1 // loop_body
      %s30 = ssub.s32 %s25, 1
      %s31 = ssub.s32 %s25, 2
      %s32 = sadd.s32 %s25, 1
      %s33 = ssub.s32 %s25, %s32
      %p34 = scmp.eq.s32.totalorder %s33, 0
      %s36 = sadd.s32 %s35, 1
      %s37 = scalar_select %p34, %s35, %s36
      %p40 = pneg %p34
      %p41 = scmp.eq.s32.totalorder %s25, 1
      %p42 = por %p40, %p41
      %p43 = scmp.ne.s32.totalorder %s35, %s38
      %p44 = scmp.eq.s32.totalorder %s25, 0
      %p45 = por %p43, %p44
      %p46 = scmp.ne.s32.totalorder %s35, %s38
      %p47 = scmp.eq.s32.totalorder %s30, 1
      %p48 = por %p46, %p47
      %p49 = scmp.ne.s32.totalorder %s38, %s39
      %p50 = scmp.eq.s32.totalorder %s30, 0
      %p51 = por %p49, %p50
      %p52 = scmp.ne.s32.totalorder %s38, %s39
      %p53 = scmp.eq.s32.totalorder %s31, 1
      %p54 = por %p52, %p53
      %p56 = scmp.ne.s32.totalorder %s39, %s55
      %p57 = scmp.eq.s32.totalorder %s31, 0
      %p58 = por %p56, %p57
      %s59 = ssub.s32 %s25, %s32
      %p60 = scmp.eq.s32.totalorder %s59, 0
      %s62 = sadd.s32 %s61, 1
      %s63 = scalar_select %p60, %s61, %s62
      %p66 = pneg %p60
      %p67 = scmp.eq.s32.totalorder %s25, 1
      %p68 = por %p66, %p67
      %p69 = scmp.ne.s32.totalorder %s61, %s64
      %p70 = scmp.eq.s32.totalorder %s25, 0
      %p71 = por %p69, %p70
      %p72 = scmp.ne.s32.totalorder %s61, %s64
      %p73 = scmp.eq.s32.totalorder %s30, 1
      %p74 = por %p72, %p73
      %p75 = scmp.ne.s32.totalorder %s64, %s65
      %p76 = scmp.eq.s32.totalorder %s30, 0
      %p77 = por %p75, %p76
      %p78 = scmp.ne.s32.totalorder %s64, %s65
      %p79 = scmp.eq.s32.totalorder %s31, 1
      %p80 = por %p78, %p79
      %p82 = scmp.ne.s32.totalorder %s65, %s81
      %p83 = scmp.eq.s32.totalorder %s31, 0
      %p84 = por %p82, %p83
      %s86 = sadd.s32 %s85, 1
      %p89 = scmp.eq.s32.totalorder %s25, 1
      %p90 = scmp.ne.s32.totalorder %s85, %s87
      %p91 = scmp.eq.s32.totalorder %s25, 0
      %p92 = por %p90, %p91
      %p93 = scmp.ne.s32.totalorder %s85, %s87
      %p94 = scmp.eq.s32.totalorder %s30, 1
      %p95 = por %p93, %p94
      %p96 = scmp.ne.s32.totalorder %s87, %s88
      %p97 = scmp.eq.s32.totalorder %s30, 0
      %p98 = por %p96, %p97
      %p99 = scmp.ne.s32.totalorder %s87, %s88
      %p100 = scmp.eq.s32.totalorder %s31, 1
      %p101 = por %p99, %p100
      %p103 = scmp.ne.s32.totalorder %s88, %s102
      %p104 = scmp.eq.s32.totalorder %s31, 0
      %p105 = por %p103, %p104
      %s107 = sadd.s32 %s106, 1
      %p110 = scmp.eq.s32.totalorder %s25, 1
      %p111 = scmp.ne.s32.totalorder %s106, %s108
      %p112 = scmp.eq.s32.totalorder %s25, 0
      %p113 = por %p111, %p112
      %p114 = scmp.ne.s32.totalorder %s106, %s108
      %p115 = scmp.eq.s32.totalorder %s30, 1
      %p116 = por %p114, %p115
      %p117 = scmp.ne.s32.totalorder %s108, %s109
      %p118 = scmp.eq.s32.totalorder %s30, 0
      %p119 = por %p117, %p118
      %p120 = scmp.ne.s32.totalorder %s108, %s109
      %p121 = scmp.eq.s32.totalorder %s31, 1
      %p122 = por %p120, %p121
      %p124 = scmp.ne.s32.totalorder %s109, %s123
      %p125 = scmp.eq.s32.totalorder %s31, 0
      %p126 = por %p124, %p125
      %s127 = ssub.s32 %s25, %s32
      %p128 = scmp.eq.s32.totalorder %s127, 0
      %s130 = sadd.s32 %s129, 1
      %s131 = scalar_select %p128, %s129, %s130
      %p134 = pneg %p128
      %p135 = scmp.eq.s32.totalorder %s25, 1
      %p136 = por %p134, %p135
      %p137 = scmp.ne.s32.totalorder %s129, %s132
      %p138 = scmp.eq.s32.totalorder %s25, 0
      %p139 = por %p137, %p138
      %p140 = scmp.ne.s32.totalorder %s129, %s132
      %p141 = scmp.eq.s32.totalorder %s30, 1
      %p142 = por %p140, %p141
      %p143 = scmp.ne.s32.totalorder %s132, %s133
      %p144 = scmp.eq.s32.totalorder %s30, 0
      %p145 = por %p143, %p144
      %p146 = scmp.ne.s32.totalorder %s132, %s133
      %p147 = scmp.eq.s32.totalorder %s31, 1
      %p148 = por %p146, %p147
      %p150 = scmp.ne.s32.totalorder %s133, %s149
      %p151 = scmp.eq.s32.totalorder %s31, 0
      %p152 = por %p150, %p151
      %s153 = ssub.s32 %s25, %s32
      %p154 = scmp.eq.s32.totalorder %s153, 0
      %s156 = sadd.s32 %s155, 1
      %s157 = scalar_select %p154, %s155, %s156
      %p160 = pneg %p154
      %p161 = scmp.eq.s32.totalorder %s25, 1
      %p162 = por %p160, %p161
      %p163 = scmp.ne.s32.totalorder %s155, %s158
      %p164 = scmp.eq.s32.totalorder %s25, 0
      %p165 = por %p163, %p164
      %p166 = scmp.ne.s32.totalorder %s155, %s158
      %p167 = scmp.eq.s32.totalorder %s30, 1
      %p168 = por %p166, %p167
      %p169 = scmp.ne.s32.totalorder %s158, %s159
      %p170 = scmp.eq.s32.totalorder %s30, 0
      %p171 = por %p169, %p170
      %p172 = scmp.ne.s32.totalorder %s158, %s159
      %p173 = scmp.eq.s32.totalorder %s31, 1
      %p174 = por %p172, %p173
      %p176 = scmp.ne.s32.totalorder %s159, %s175
      %p177 = scmp.eq.s32.totalorder %s31, 0
      %p178 = por %p176, %p177
      %s179 = ssub.s32 %s25, %s32
      %p180 = scmp.eq.s32.totalorder %s179, 0
      %s182 = sadd.s32 %s181, 1
      %s183 = scalar_select %p180, %s181, %s182
      %p186 = pneg %p180
      %p187 = scmp.eq.s32.totalorder %s25, 1
      %p188 = por %p186, %p187
      %p189 = scmp.ne.s32.totalorder %s181, %s184
      %p190 = scmp.eq.s32.totalorder %s25, 0
      %p191 = por %p189, %p190
      %p192 = scmp.ne.s32.totalorder %s181, %s184
      %p193 = scmp.eq.s32.totalorder %s30, 1
      %p194 = por %p192, %p193
      %p195 = scmp.ne.s32.totalorder %s184, %s185
      %p196 = scmp.eq.s32.totalorder %s30, 0
      %p197 = por %p195, %p196
      %p198 = scmp.ne.s32.totalorder %s184, %s185
      %p199 = scmp.eq.s32.totalorder %s31, 1
      %p200 = por %p198, %p199
      %p202 = scmp.ne.s32.totalorder %s185, %s201
      %p203 = scmp.eq.s32.totalorder %s31, 0
      %p204 = por %p202, %p203
      %p205 = scmp.le.s32.totalorder 1, %s25
      %p206 = scmp.lt.s32.totalorder %s25, 3
      %p207 = pnand %p205, %p206
      %p208 = pneg %p207
      // Predicated region
      $region9: #{tpu_custom_call.1} parent=5 // pred_check
        _
      $region10: #{tpu_custom_call.1} parent=5 // pred_check_branch
        %210 = sbr.rel (%p207) target = $region12
      $region11: #{tpu_custom_call.1} parent=5 // pred_region
        %s211 = ssub.s32 %s25, 1
        // Predicated region
        $region13: #{tpu_custom_call.1} parent=11 // pred_check
          %p212 = pneg %p98
        $region14: #{tpu_custom_call.1} parent=11 // pred_check_branch
          %214 = sbr.rel (%p212) target = $region16
        $region15: #{tpu_custom_call.1} parent=11 // pred_region
          %s216 = ssub.s32 256, 256
          %217 = vsyncadd [#allocation6], %s216
          %s218 = sshll.u32 [#allocation7], 4
          %s219 = int_to_ptr.vmem [resolvable:$true] %s218
          %224 = dma.hbm_to_vmem [thread:$0]  %s2, 256, %s219, [#allocation6], 128, 128, 8
        $region16: #{tpu_custom_call.1} parent=11 // pred_fallthru
          _
        // Predicated region
        $region17: #{tpu_custom_call.1} parent=11 // pred_check
          %p225 = pneg %p119
        $region18: #{tpu_custom_call.1} parent=11 // pred_check_branch
          %227 = sbr.rel (%p225) target = $region20
        $region19: #{tpu_custom_call.1} parent=11 // pred_region
          _
        $region20: #{tpu_custom_call.1} parent=11 // pred_fallthru
          _
      $region12: #{tpu_custom_call.1} parent=5 // pred_fallthru
        _
      %p228 = scmp.lt.s32.totalorder %s25, 2
      // Predicated region
      $region21: #{tpu_custom_call.1} parent=5 // pred_check
        %p229 = pneg %p228
      $region22: #{tpu_custom_call.1} parent=5 // pred_check_branch
        %231 = sbr.rel (%p229) target = $region24
      $region23: #{tpu_custom_call.1} parent=5 // pred_region
        // Predicated region
        $region25: #{tpu_custom_call.1} parent=23 // pred_check
          %p232 = pneg %p45
        $region26: #{tpu_custom_call.1} parent=23 // pred_check_branch
          %234 = sbr.rel (%p232) target = $region28
        $region27: #{tpu_custom_call.1} parent=23 // pred_region
          %s235 = sand.u32 %s35, 1
          %s236 = scalar_lea.sflag [#allocation3], %s235
          %s237 = sand.u32 %s35, 1
          %s238 = smul.addr %s237, 16
          %s239 = scalar_lea.vmem [#allocation2], %s238
          %s241 = ssub.s32 256, 256
          %242 = vsyncadd %s236, %s241
          %s243 = smul.addr %s25, 2
          %s244 = smul.addr %s243, 128
          %s245 = scalar_lea.hbm %s0, %s244
          %s246 = sshll.u32 %s239, 4
          %s247 = int_to_ptr.vmem [resolvable:$true] %s246
          %252 = dma.hbm_to_vmem [thread:$0]  %s245, 256, %s247, %s236, 128, 128, 8
        $region28: #{tpu_custom_call.1} parent=23 // pred_fallthru
          _
        // Predicated region
        $region29: #{tpu_custom_call.1} parent=23 // pred_check
          %p253 = pneg %p71
        $region30: #{tpu_custom_call.1} parent=23 // pred_check_branch
          %255 = sbr.rel (%p253) target = $region32
        $region31: #{tpu_custom_call.1} parent=23 // pred_region
          %s256 = sand.u32 %s25, 1
          %s257 = scalar_lea.sflag [#allocation6], %s256
          %s258 = sand.u32 %s61, 1
          %s259 = smul.addr %s258, 16
          %s260 = scalar_lea.vmem [#allocation5], %s259
          %s262 = ssub.s32 256, 256
          %263 = vsyncadd %s257, %s262
          %s264 = smul.addr %s25, 2
          %s265 = smul.addr %s264, 128
          %s266 = scalar_lea.hbm %s1, %s265
          %s267 = sshll.u32 %s260, 4
          %s268 = int_to_ptr.vmem [resolvable:$true] %s267
          %273 = dma.hbm_to_vmem [thread:$0]  %s266, 256, %s268, %s257, 128, 128, 8
        $region32: #{tpu_custom_call.1} parent=23 // pred_fallthru
          _
      $region24: #{tpu_custom_call.1} parent=5 // pred_fallthru
        _
      %p274 = scmp.le.s32.totalorder 1, %s25
      %p275 = scmp.lt.s32.totalorder %s25, 3
      %p276 = pnand %p274, %p275
      %p277 = pneg %p276
      // Predicated region
      $region33: #{tpu_custom_call.1} parent=5 // pred_check
        _
      $region34: #{tpu_custom_call.1} parent=5 // pred_check_branch
        %279 = sbr.rel (%p276) target = $region36
      $region35: #{tpu_custom_call.1} parent=5 // pred_region
        %s280 = ssub.s32 %s25, 1
        %s281 = sand.u32 %s38, 1
        %s282 = scalar_lea.sflag [#allocation3], %s281
        %s283 = sand.u32 %s38, 1
        %s284 = smul.addr %s283, 16
        %s285 = scalar_lea.vmem [#allocation2], %s284
        // Predicated region
        $region37: #{tpu_custom_call.1} parent=35 // pred_check
          %p286 = pneg %p51
        $region38: #{tpu_custom_call.1} parent=35 // pred_check_branch
          %288 = sbr.rel (%p286) target = $region40
        $region39: #{tpu_custom_call.1} parent=35 // pred_region
          %289 = dma.done %s282, 256
        $region40: #{tpu_custom_call.1} parent=35 // pred_fallthru
          _
        %s290 = sand.u32 %s30, 1
        %s291 = scalar_lea.sflag [#allocation6], %s290
        %s292 = sand.u32 %s64, 1
        %s293 = smul.addr %s292, 16
        %s294 = scalar_lea.vmem [#allocation5], %s293
        // Predicated region
        $region41: #{tpu_custom_call.1} parent=35 // pred_check
          %p295 = pneg %p77
        $region42: #{tpu_custom_call.1} parent=35 // pred_check_branch
          %297 = sbr.rel (%p295) target = $region44
        $region43: #{tpu_custom_call.1} parent=35 // pred_region
          %298 = dma.done %s291, 256
        $region44: #{tpu_custom_call.1} parent=35 // pred_fallthru
          _
        // Predicated region
        $region45: #{tpu_custom_call.1} parent=35 // pred_check
          %p299 = pneg %p98
        $region46: #{tpu_custom_call.1} parent=35 // pred_check_branch
          %301 = sbr.rel (%p299) target = $region48
        $region47: #{tpu_custom_call.1} parent=35 // pred_region
          %302 = dma.done [#allocation6], 256
        $region48: #{tpu_custom_call.1} parent=35 // pred_fallthru
          _
        %s303 = sand.u32 %s38, 1
        %s304 = scalar_lea.sflag [#allocation3], %s303
        %s305 = sand.u32 %s38, 1
        %s306 = smul.addr %s305, 16
        %s307 = scalar_lea.vmem [#allocation2], %s306
        %p308 = pneg %p51
        %p309 = pneg %p48
        %s310 = sand.u32 %s30, 1
        %s311 = scalar_lea.sflag [#allocation6], %s310
        %s312 = sand.u32 %s64, 1
        %s313 = smul.addr %s312, 16
        %s314 = scalar_lea.vmem [#allocation5], %s313
        %p315 = pneg %p77
        %p316 = pneg %p74
        %p317 = pneg %p98
        %p318 = pneg %p95
        %p319 = pneg %p119
        %p320 = pneg %p116
        %p321 = pneg %p145
        %p322 = pneg %p142
        %s323 = sand.u32 %s132, 1
        %s324 = scalar_lea.sflag [#allocation4], %s323
        %s325 = sand.u32 %s132, 1
        %s326 = smul.addr %s325, 16
        %s327 = scalar_lea.vmem [#allocation8], %s326
        %p328 = pneg %p171
        %p329 = pneg %p168
        %s330 = sand.u32 %s30, 1
        %s331 = scalar_lea.sflag [#allocation10], %s330
        %s332 = sand.u32 %s158, 1
        %s333 = scalar_lea.vmem [#allocation9], %s332
        %p334 = pneg %p197
        %p335 = pneg %p194
        %s336 = sand.u32 %s30, 1
        %s337 = scalar_lea.sflag [#allocation10], %s336
        %s338 = sand.u32 %s184, 1
        %s339 = scalar_lea.vmem [#allocation11], %s338
        %s340 = smul.u32 2, %s30
        %v341 = vld [vmem:[%s294] sm:$0xff]
        %v342 = vld [vmem:[%s294 + $0x8] sm:$0xff]
        %v343 = vld [vmem:[%s285] sm:$0xff]
        %v344 = vld [vmem:[%s285 + $0x8] sm:$0xff]
        %vm345 = vcmask 130048
        %v347 = vsel %vm345, %v341, 0
        %v350 = vsel %vm345, %v342, 0
        %352 = vmatprep.subr.mxu0 0.0
        %353 = vmatpush1.msra.mxu0 %v343
        %354 = vmatprep.subr.mxu0 0.0
        %355 = vmatpush1.msra.mxu0 %v344
        %356 = vmatprep.subr.mxu0 0.0
        %357 = vmatpush1.msra.mxu0 0.0
        %358 = vmatprep.subr.mxu0 0.0
        %359 = vmatpush1.msra.mxu0 0.0
        %360 = vmatprep.subr.mxu0 0.0
        %361 = vmatpush1.msra.mxu0 0.0
        %362 = vmatprep.subr.mxu0 0.0
        %363 = vmatpush1.msra.mxu0 0.0
        %364 = vmatprep.subr.mxu0 0.0
        %365 = vmatpush1.msra.mxu0 0.0
        %366 = vmatprep.subr.mxu0 0.0
        %367 = vmatpush1.msra.mxu0 0.0
        %368 = vmatprep.subr.mxu0 0.0
        %369 = vmatpush1.msra.mxu0 0.0
        %370 = vmatprep.subr.mxu0 0.0
        %371 = vmatpush1.msra.mxu0 0.0
        %372 = vmatprep.subr.mxu0 0.0
        %373 = vmatpush1.msra.mxu0 0.0
        %374 = vmatprep.subr.mxu0 0.0
        %375 = vmatpush1.msra.mxu0 0.0
        %376 = vmatprep.subr.mxu0 0.0
        %377 = vmatpush1.msra.mxu0 0.0
        %378 = vmatprep.subr.mxu0 0.0
        %379 = vmatpush1.msra.mxu0 0.0
        %380 = vmatprep.subr.mxu0 0.0
        %381 = vmatpush1.msra.mxu0 0.0
        %382 = vmatprep.subr.mxu0 0.0
        %383 = vmatpush1.msra.mxu0 0.0
        %384 = vmatprep.subr.mxu0 0.0
        %385 = vmatpush1.msra.mxu0 0.0
        %386 = vmatprep.subr.mxu0 0.0
        %387 = vmatpush1.msra.mxu0 0.0
        %388 = vmatprep.subr.mxu0 0.0
        %389 = vmatpush1.msra.mxu0 0.0
        %390 = vmatprep.subr.mxu0 0.0
        %391 = vmatpush1.msra.mxu0 0.0
        %392 = vmatprep.subr.mxu0 0.0
        %393 = vmatpush1.msra.mxu0 0.0
        %394 = vmatprep.subr.mxu0 0.0
        %395 = vmatpush1.msra.mxu0 0.0
        %396 = vmatprep.subr.mxu0 0.0
        %397 = vmatpush1.msra.mxu0 0.0
        %398 = vmatprep.subr.mxu0 0.0
        %399 = vmatpush1.msra.mxu0 0.0
        %400 = vmatprep.subr.mxu0 0.0
        %401 = vmatpush1.msra.mxu0 0.0
        %402 = vmatprep.subr.mxu0 0.0
        %403 = vmatpush1.msra.mxu0 0.0
        %404 = vmatprep.subr.mxu0 0.0
        %405 = vmatpush1.msra.mxu0 0.0
        %406 = vmatprep.subr.mxu0 0.0
        %407 = vmatpush1.msra.mxu0 0.0
        %408 = vmatprep.subr.mxu0 0.0
        %409 = vmatpush1.msra.mxu0 0.0
        %410 = vmatprep.subr.mxu0 0.0
        %411 = vmatpush1.msra.mxu0 0.0
        %412 = vmatprep.subr.mxu0 0.0
        %413 = vmatpush1.msra.mxu0 0.0
        %414 = vmatprep.subr.mxu0 0.0
        %415 = vmatpush1.msra.mxu0 0.0
        %416 = vmatprep.mubr.f32.mxu0 0.0
        %417 = vmatmul.mubr.f32.gmra.mrb[0].mxu0 %v347
        %v418 = vpop.f32.mrb[0].mxu0
        %v419 = vadd.f32 0.0, %v418
        %v420 = vpop.f32.mrb[0].mxu0
        %421 = vmatprep.mubr.f32.mxu0 0.0
        %422 = vmatmul.mubr.f32.gmra.mrb[0].mxu0 %v350
        %v423 = vpop.f32.mrb[0].mxu0
        %v424 = vadd.f32 0.0, %v423
        %v425 = vpop.f32.mrb[0].mxu0
        %426 = vdwg.mxu0
        %v427 = vld [vmem:[#allocation7] sm:$0xff]
        %v428 = vld [vmem:[#allocation7 + $0x8] sm:$0xff]
        %v429 = vld [vmem:[%s3] sm:$0x1]
        %v431 = vlaneseq
        %v432 = vshrl.u32 %v431, 7
        %v433 = vsub.s32 0, %v432
        %v434 = vrot.slane %v429, %v433
        %v437 = vsel %vm345, %v419, 0
        %v440 = vsel %vm345, %v424, 0
        %442 = vmatprep.subr.mxu0 0.0
        %443 = vmatpush1.msra.mxu0 %v427
        %444 = vmatprep.subr.mxu0 0.0
        %445 = vmatpush1.msra.mxu0 %v428
        %446 = vmatprep.subr.mxu0 0.0
        %447 = vmatpush1.msra.mxu0 0.0
        %448 = vmatprep.subr.mxu0 0.0
        %449 = vmatpush1.msra.mxu0 0.0
        %450 = vmatprep.subr.mxu0 0.0
        %451 = vmatpush1.msra.mxu0 0.0
        %452 = vmatprep.subr.mxu0 0.0
        %453 = vmatpush1.msra.mxu0 0.0
        %454 = vmatprep.subr.mxu0 0.0
        %455 = vmatpush1.msra.mxu0 0.0
        %456 = vmatprep.subr.mxu0 0.0
        %457 = vmatpush1.msra.mxu0 0.0
        %458 = vmatprep.subr.mxu0 0.0
        %459 = vmatpush1.msra.mxu0 0.0
        %460 = vmatprep.subr.mxu0 0.0
        %461 = vmatpush1.msra.mxu0 0.0
        %462 = vmatprep.subr.mxu0 0.0
        %463 = vmatpush1.msra.mxu0 0.0
        %464 = vmatprep.subr.mxu0 0.0
        %465 = vmatpush1.msra.mxu0 0.0
        %466 = vmatprep.subr.mxu0 0.0
        %467 = vmatpush1.msra.mxu0 0.0
        %468 = vmatprep.subr.mxu0 0.0
        %469 = vmatpush1.msra.mxu0 0.0
        %470 = vmatprep.subr.mxu0 0.0
        %471 = vmatpush1.msra.mxu0 0.0
        %472 = vmatprep.subr.mxu0 0.0
        %473 = vmatpush1.msra.mxu0 0.0
        %474 = vmatprep.subr.mxu0 0.0
        %475 = vmatpush1.msra.mxu0 0.0
        %476 = vmatprep.subr.mxu0 0.0
        %477 = vmatpush1.msra.mxu0 0.0
        %478 = vmatprep.subr.mxu0 0.0
        %479 = vmatpush1.msra.mxu0 0.0
        %480 = vmatprep.subr.mxu0 0.0
        %481 = vmatpush1.msra.mxu0 0.0
        %482 = vmatprep.subr.mxu0 0.0
        %483 = vmatpush1.msra.mxu0 0.0
        %484 = vmatprep.subr.mxu0 0.0
        %485 = vmatpush1.msra.mxu0 0.0
        %486 = vmatprep.subr.mxu0 0.0
        %487 = vmatpush1.msra.mxu0 0.0
        %488 = vmatprep.subr.mxu0 0.0
        %489 = vmatpush1.msra.mxu0 0.0
        %490 = vmatprep.subr.mxu0 0.0
        %491 = vmatpush1.msra.mxu0 0.0
        %492 = vmatprep.subr.mxu0 0.0
        %493 = vmatpush1.msra.mxu0 0.0
        %494 = vmatprep.subr.mxu0 0.0
        %495 = vmatpush1.msra.mxu0 0.0
        %496 = vmatprep.subr.mxu0 0.0
        %497 = vmatpush1.msra.mxu0 0.0
        %498 = vmatprep.subr.mxu0 0.0
        %499 = vmatpush1.msra.mxu0 0.0
        %500 = vmatprep.subr.mxu0 0.0
        %501 = vmatpush1.msra.mxu0 0.0
        %502 = vmatprep.subr.mxu0 0.0
        %503 = vmatpush1.msra.mxu0 0.0
        %504 = vmatprep.subr.mxu0 0.0
        %505 = vmatpush1.msra.mxu0 0.0
        %506 = vmatprep.mubr.f32.mxu0 0.0
        %507 = vmatmul.mubr.f32.gmra.mrb[0].mxu0 %v437
        %v508 = vpop.f32.mrb[0].mxu0
        %v509 = vadd.f32 %v434, %v508
        %v510 = vpop.f32.mrb[0].mxu0
        %511 = vmatprep.mubr.f32.mxu0 0.0
        %512 = vmatmul.mubr.f32.gmra.mrb[0].mxu0 %v440
        %v513 = vpop.f32.mrb[0].mxu0
        %v514 = vadd.f32 %v434, %v513
        %v515 = vpop.f32.mrb[0].mxu0
        %516 = vdwg.mxu0
        %vm517 = vcmask 261120
        %v518 = vsel %vm517, %v509, 0.0
        %v519 = vsel %vm517, %v514, 0.0
        %v520 = vadd.f32 %v518, %v519
        %v521 = vrot.slane %v520, 4
        %v522 = vadd.f32 %v520, %v521
        %v523 = vrot.slane %v522, 2
        %v524 = vadd.f32 %v522, %v523
        %v525 = vrot.slane %v524, 1
        %v526 = vadd.f32 %v524, %v525
        %vm527 = vcmask 253952
        %528 = vst.msk [vmem:[%s333] sm:$0x1] %vm527, %v526
        %v529 = vmul.f32 %v509, %v509
        %v530 = vmul.f32 %v514, %v514
        %v531 = vsel %vm517, %v529, 0.0
        %v532 = vsel %vm517, %v530, 0.0
        %v533 = vadd.f32 %v531, %v532
        %v534 = vrot.slane %v533, 4
        %v535 = vadd.f32 %v533, %v534
        %v536 = vrot.slane %v535, 2
        %v537 = vadd.f32 %v535, %v536
        %v538 = vrot.slane %v537, 1
        %v539 = vadd.f32 %v537, %v538
        %540 = vst.msk [vmem:[%s339] sm:$0x1] %vm527, %v539
        %541 = vst.msk [vmem:[%s327] sm:$0xff] %vm517, %v509
        %542 = vst.msk [vmem:[%s327 + $0x8] sm:$0xff] %vm517, %v514
        %s543 = sand.u32 %s132, 1
        %s544 = scalar_lea.sflag [#allocation4], %s543
        %s545 = sand.u32 %s132, 1
        %s546 = smul.addr %s545, 16
        %s547 = scalar_lea.vmem [#allocation8], %s546
        %s548 = sand.u32 %s30, 1
        %s549 = scalar_lea.sflag [#allocation10], %s548
        %s550 = sand.u32 %s158, 1
        %s551 = scalar_lea.vmem [#allocation9], %s550
        %s552 = sand.u32 %s30, 1
        %s553 = scalar_lea.sflag [#allocation10], %s552
        %s554 = sand.u32 %s184, 1
        %s555 = scalar_lea.vmem [#allocation11], %s554
        // Predicated region
        $region49: #{tpu_custom_call.1} parent=35 // pred_check
          %p556 = pneg %p142
        $region50: #{tpu_custom_call.1} parent=35 // pred_check_branch
          %558 = sbr.rel (%p556) target = $region52
        $region51: #{tpu_custom_call.1} parent=35 // pred_region
          %s559 = smul.u32 2, %s30
          %s561 = ssub.s32 256, 256
          %562 = vsyncadd %s544, %s561
          %s563 = smul.addr %s559, 128
          %s564 = scalar_lea.hbm %s4, %s563
          %s565 = sshll.u32 %s547, 4
          %s566 = int_to_ptr.vmem [resolvable:$true] %s565
          %571 = dma.vmem_to_hbm [thread:$0]  %s566, 256, %s564, %s544, 128, 128, 8
        $region52: #{tpu_custom_call.1} parent=35 // pred_fallthru
          _
        // Predicated region
        $region53: #{tpu_custom_call.1} parent=35 // pred_check
          %p572 = pneg %p168
        $region54: #{tpu_custom_call.1} parent=35 // pred_check_branch
          %574 = sbr.rel (%p572) target = $region56
        $region55: #{tpu_custom_call.1} parent=35 // pred_region
          %s576 = ssub.s32 16, 16
          %577 = vsyncadd %s549, %s576
          %s578 = smul.addr %s30, 16
          %s579 = scalar_lea.hbm %s5, %s578
          %s581 = sshll.u32 %s551, 4
          %s582 = int_to_ptr.vmem [resolvable:$true] %s581
          %584 = dma.vmem_to_hbm [thread:$0]  %s582, 16, %s579, %s549
        $region56: #{tpu_custom_call.1} parent=35 // pred_fallthru
          _
        // Predicated region
        $region57: #{tpu_custom_call.1} parent=35 // pred_check
          %p585 = pneg %p194
        $region58: #{tpu_custom_call.1} parent=35 // pred_check_branch
          %587 = sbr.rel (%p585) target = $region60
        $region59: #{tpu_custom_call.1} parent=35 // pred_region
          %s589 = ssub.s32 16, 16
          %590 = vsyncadd %s553, %s589
          %s591 = smul.addr %s30, 16
          %s592 = scalar_lea.hbm %s6, %s591
          %s594 = sshll.u32 %s555, 4
          %s595 = int_to_ptr.vmem [resolvable:$true] %s594
          %597 = dma.vmem_to_hbm [thread:$0]  %s595, 16, %s592, %s553
        $region60: #{tpu_custom_call.1} parent=35 // pred_fallthru
          _
      $region36: #{tpu_custom_call.1} parent=5 // pred_fallthru
        _
      %p598 = scmp.le.s32.totalorder 2, %s25
      // Predicated region
      $region61: #{tpu_custom_call.1} parent=5 // pred_check
        %p599 = pneg %p598
      $region62: #{tpu_custom_call.1} parent=5 // pred_check_branch
        %601 = sbr.rel (%p599) target = $region64
      $region63: #{tpu_custom_call.1} parent=5 // pred_region
        %s602 = ssub.s32 %s25, 2
        // Predicated region
        $region65: #{tpu_custom_call.1} parent=63 // pred_check
          %p603 = pneg %p148
        $region66: #{tpu_custom_call.1} parent=63 // pred_check_branch
          %605 = sbr.rel (%p603) target = $region68
        $region67: #{tpu_custom_call.1} parent=63 // pred_region
          %s606 = sand.u32 %s133, 1
          %s607 = scalar_lea.sflag [#allocation4], %s606
          %s608 = sand.u32 %s133, 1
          %s609 = smul.addr %s608, 16
          %s610 = scalar_lea.vmem [#allocation8], %s609
          %611 = dma.done %s607, 256
        $region68: #{tpu_custom_call.1} parent=63 // pred_fallthru
          _
        // Predicated region
        $region69: #{tpu_custom_call.1} parent=63 // pred_check
          %p612 = pneg %p174
        $region70: #{tpu_custom_call.1} parent=63 // pred_check_branch
          %614 = sbr.rel (%p612) target = $region72
        $region71: #{tpu_custom_call.1} parent=63 // pred_region
          %s615 = sand.u32 %s31, 1
          %s616 = scalar_lea.sflag [#allocation10], %s615
          %s617 = sand.u32 %s159, 1
          %s618 = scalar_lea.vmem [#allocation9], %s617
          %619 = dma.done %s616, 16
        $region72: #{tpu_custom_call.1} parent=63 // pred_fallthru
          _
        // Predicated region
        $region73: #{tpu_custom_call.1} parent=63 // pred_check
          %p620 = pneg %p200
        $region74: #{tpu_custom_call.1} parent=63 // pred_check_branch
          %622 = sbr.rel (%p620) target = $region76
        $region75: #{tpu_custom_call.1} parent=63 // pred_region
          %s623 = sand.u32 %s31, 1
          %s624 = scalar_lea.sflag [#allocation10], %s623
          %s625 = sand.u32 %s185, 1
          %s626 = scalar_lea.vmem [#allocation11], %s625
          %627 = dma.done %s624, 16
        $region76: #{tpu_custom_call.1} parent=63 // pred_fallthru
          _
      $region64: #{tpu_custom_call.1} parent=5 // pred_fallthru
        _
    $region6: #{tpu_custom_call.1} parent=1 // loop_footer
      %s29 = sadd.s32 1, %s25
    $region7: #{tpu_custom_call.1} parent=1 // loop_footer_branch
      %24 = sbr.rel target = $region3
    $region8: #{tpu_custom_call.1} parent=1 // loop_exit
      _
    %628 = vsyncpa [#allocation3], 1
    %s629 = scalar_lea.sflag [#allocation3], 1
    %630 = vsyncpa %s629, 1
    %631 = vsyncpa [#allocation6], 1
    %s632 = scalar_lea.sflag [#allocation6], 1
    %633 = vsyncpa %s632, 1
    %634 = vsyncpa [#allocation4], 1
    %s635 = scalar_lea.sflag [#allocation4], 1
    %636 = vsyncpa %s635, 1
    %637 = vsyncpa [#allocation10], 1
    %s638 = scalar_lea.sflag [#allocation10], 1
    %639 = vsyncpa %s638, 1

</llo_original>
